<compile_context>
chip_gen: v5e
topology: v5e:2x2
jax: 0.10.0
libtpu: 0.0.40
codegen_flags: <defaults>
</compile_context>

<pallas_src>
import jax
import jax.numpy as jnp
from jax.experimental import pallas as pl
from jax.experimental.pallas import tpu as pltpu

_MIB = 1 << 20


def _round_up(x, m):
    return ((x + m - 1) // m) * m


def _vmem_capacity_bytes():
    try:
        return int(pltpu.get_tpu_info().vmem_capacity_bytes)
    except Exception:
        return 64 * _MIB  # conservative default (v7x per-TensorCore)


def _resident_spec(shape):
    """BlockSpec for a grid-constant (VMEM-resident) operand.

    pipeline_mode=pl.Buffered(1) drops the dead second pipeline buffer the
    default double-buffering would allocate for an operand whose index_map
    never changes.
    """
    idx_map = lambda i: (0,) * len(shape)
    try:
        return pl.BlockSpec(shape, idx_map, pipeline_mode=pl.Buffered(1))
    except Exception:
        return pl.BlockSpec(shape, idx_map)


def _pad2(a, rows, cols):
    pr, pc = rows - a.shape[0], cols - a.shape[1]
    if pr == 0 and pc == 0:
        return a
    return jnp.pad(a, ((0, pr), (0, pc)))


def attention_unit_kernel(x_ref, w1_ref, b1_ref, w2_ref, b2_ref,
                          w3_ref, b3_ref, o_ref):
    """One (tile_m, Hp) row tile of the 3-layer MLP + sigmoid.

    x_ref : (tile_m, Hp)  f32 (cast to mm_dtype in-kernel)
    w1/w2 : (Hp, Hp)      mm_dtype, VMEM-resident (single-buffered)
    b1/b2 : (1, Hp)       f32
    w3    : (Hp, 1)       mm_dtype (H->1 projection column)
    b3    : (1, 1)        f32
    o_ref : (tile_m, 1)   f32
    """
    mm_dtype = w1_ref.dtype

    x = x_ref[...].astype(mm_dtype)                                     # (TM, Hp)
    h1 = jnp.dot(x, w1_ref[...], preferred_element_type=jnp.float32)   # MXU, f32 acc
    h1 = jnp.maximum(h1 + b1_ref[...], 0.0).astype(mm_dtype)           # relu -> mm_dtype

    h2 = jnp.dot(h1, w2_ref[...], preferred_element_type=jnp.float32)  # MXU, f32 acc
    h2 = jnp.maximum(h2 + b2_ref[...], 0.0).astype(mm_dtype)           # relu -> mm_dtype

    # Layer 3: (TM, Hp) @ (Hp, 1) -> (TM, 1).  No transpose of h2 is needed and
    # layer-3 FLOPs are 1/Hp of layers 1-2, so the narrow MXU column is cheap.
    z = jnp.dot(h2, w3_ref[...], preferred_element_type=jnp.float32)   # (TM, 1)
    z = z + b3_ref[...]
    o_ref[...] = jax.nn.sigmoid(z).astype(o_ref.dtype)


def reference(thoughts, params):
    """Pure-JAX reference (also the tiny-problem fast path)."""
    w1, b1, w2, b2, w3, b3 = params
    x = jnp.maximum(thoughts @ w1 + b1[0], 0.0)
    x = jnp.maximum(x @ w2 + b2[0], 0.0)
    x = x @ w3 + b3[0]
    return jax.nn.sigmoid(x)


def _select_tile_m(M, Hp, mm_bytes, vmem_cap):
    """Pick a row tile that amortizes grid overhead yet fits the VMEM budget."""
    budget = max(vmem_cap - 8 * _MIB, 16 * _MIB)
    weight_bytes = 2 * Hp * Hp * mm_bytes + 8 * Hp * 4          # single-buffered W1/W2 + small operands
    # Per-row footprint: double-buffered f32 x, f32 h1/h2, mm_dtype-bound copies, output.
    per_row = Hp * (2 * 4 + 4 + mm_bytes + 4 + mm_bytes) + 16
    avail = budget - weight_bytes

    tm = max(256, min(4096, (2 * 1024 * 1024) // Hp))            # amortize ~0.35us grid-step cost
    if avail > 0:
        tm = min(tm, max(16, int(avail // per_row)))
    else:
        # TODO(synk): weights exceed VMEM here; needs the K-chunked variant.
        tm = 256
    tm = min(tm, _round_up(M, 16))
    if M > 16 and tm >= M:
        # Split into >=2 grid steps so dimension_semantics=("parallel",) can
        # shard rows across both TensorCores on v7x.
        tm = _round_up(pl.cdiv(M, 2), 16)
    tm = max(16, _round_up(int(tm), 16))
    return tm, weight_bytes, per_row


def attention_unit(thoughts, params, *, matmul_dtype=jnp.bfloat16, use_pallas=None):
    """thoughts: (B, N, H) float32 -> (B, N, 1) float32."""
    w1, b1, w2, b2, w3, b3 = params
    B, N, H = thoughts.shape
    M = B * N

    if use_pallas is None:
        # For tiny problems the fixed pallas_call launch + DMA setup dominates.
        use_pallas = (M * H) >= (1 << 15)
    if not use_pallas:
        return reference(thoughts, params)

    mm_bytes = jnp.dtype(matmul_dtype).itemsize
    vmem_cap = _vmem_capacity_bytes()

    Hp = _round_up(max(H, 128), 128)
    tm, weight_bytes, per_row = _select_tile_m(M, Hp, mm_bytes, vmem_cap)
    num_tiles = pl.cdiv(M, tm)
    Mp = num_tiles * tm

    # x stays f32; pad only when necessary (cast to mm_dtype happens in-kernel).
    x2d = _pad2(thoughts.reshape(M, H), Mp, Hp)
    w1p = _pad2(w1, Hp, Hp).astype(matmul_dtype)
    w2p = _pad2(w2, Hp, Hp).astype(matmul_dtype)
    b1p = _pad2(b1, 1, Hp).astype(jnp.float32)
    b2p = _pad2(b2, 1, Hp).astype(jnp.float32)
    w3p = _pad2(w3.reshape(H, 1), Hp, 1).astype(matmul_dtype)
    b3p = b3.astype(jnp.float32)

    # Generation-aware VMEM limit: estimated footprint with margin, never above
    # the physical per-core capacity (64 MiB on v7x, 128 MiB on v5e/v6e).
    est = weight_bytes + tm * per_row + 2 * _MIB
    vmem_limit = int(min(max(int(1.5 * est), 32 * _MIB),
                         vmem_cap - 4 * _MIB, 128 * _MIB))
    vmem_limit = max(vmem_limit, 16 * _MIB)

    out2d = pl.pallas_call(
        attention_unit_kernel,
        out_shape=jax.ShapeDtypeStruct((Mp, 1), jnp.float32),
        grid_spec=pltpu.PrefetchScalarGridSpec(
            num_scalar_prefetch=0,
            grid=(num_tiles,),
            in_specs=[
                pl.BlockSpec((tm, Hp), lambda i: (i, 0)),  # x row tile (streamed, f32)
                _resident_spec((Hp, Hp)),                  # W1 (resident, single buffer)
                _resident_spec((1, Hp)),                   # b1
                _resident_spec((Hp, Hp)),                  # W2 (resident, single buffer)
                _resident_spec((1, Hp)),                   # b2
                _resident_spec((Hp, 1)),                   # w3 column
                _resident_spec((1, 1)),                    # b3
            ],
            out_specs=pl.BlockSpec((tm, 1), lambda i: (i, 0)),
        ),
        compiler_params=pltpu.CompilerParams(
            dimension_semantics=("parallel",),
            vmem_limit_bytes=vmem_limit,
        ),
    )(x2d, w1p, b1p, w2p, b2p, w3p, b3p)

    return out2d[:M].reshape(B, N, 1)


def init_params(key, hidden_size):
    """PyTorch-style uniform(-1/sqrt(fan_in), 1/sqrt(fan_in)) init.

    Weights are stored as (in, out) so the kernel computes x @ W + b.
    """
    ks = jax.random.split(key, 6)
    bound = 1.0 / jnp.sqrt(hidden_size)
    w1 = jax.random.uniform(ks[0], (hidden_size, hidden_size), jnp.float32, -bound, bound)
    b1 = jax.random.uniform(ks[1], (1, hidden_size), jnp.float32, -bound, bound)
    w2 = jax.random.uniform(ks[2], (hidden_size, hidden_size), jnp.float32, -bound, bound)
    b2 = jax.random.uniform(ks[3], (1, hidden_size), jnp.float32, -bound, bound)
    w3 = jax.random.uniform(ks[4], (hidden_size, 1), jnp.float32, -bound, bound)
    b3 = jax.random.uniform(ks[5], (1, 1), jnp.float32, -bound, bound)
    return (w1, b1, w2, b2, w3, b3)


if __name__ == "__main__":
    key = jax.random.PRNGKey(0)
    k_in, k_par = jax.random.split(key)

    batch, seq, hidden = 2, 8, 32   # thoughts: (B, N, hidden_size)
    thoughts = jax.random.normal(k_in, (batch, seq, hidden), jnp.float32)
    params = init_params(k_par, hidden)
    ref = reference(thoughts, params)

    # Exact-math check: f32 matmul operands must match the XLA reference tightly.
    out_f32 = attention_unit(thoughts, params,
                             matmul_dtype=jnp.float32, use_pallas=True)
    out_f32 = jax.block_until_ready(out_f32)
    assert out_f32.shape == (batch, seq, 1)
    assert jnp.allclose(out_f32, ref, atol=1e-5, rtol=1e-5)

    # Fast path: bf16 MXU operands with f32 accumulation.
    out_bf16 = attention_unit(thoughts, params,
                              matmul_dtype=jnp.bfloat16, use_pallas=True)
    out_bf16 = jax.block_until_ready(out_bf16)
    assert out_bf16.shape == (batch, seq, 1)
    assert jnp.allclose(out_bf16, ref, atol=2e-2, rtol=2e-2)

    # Ragged row count (B*N not a multiple of 16/tile) exercises the padding path.
    t2 = jax.random.normal(k_in, (3, 5, hidden), jnp.float32)
    out2 = attention_unit(t2, params, matmul_dtype=jnp.float32, use_pallas=True)
    out2 = jax.block_until_ready(out2)
    assert jnp.allclose(out2, reference(t2, params), atol=1e-5, rtol=1e-5)

    print("KERNEL_OK")
</pallas_src>

<mosaic_0001>
module attributes {stable_mosaic.version = 11 : i64} {
  func.func @attention_unit_kernel(%arg0: i32, %arg1: memref<16x128xf32, #tpu.memory_space<vmem>>, %arg2: memref<128x128xf32, #tpu.memory_space<vmem>>, %arg3: memref<1x128xf32, #tpu.memory_space<vmem>>, %arg4: memref<128x128xf32, #tpu.memory_space<vmem>>, %arg5: memref<1x128xf32, #tpu.memory_space<vmem>>, %arg6: memref<128x1xf32, #tpu.memory_space<vmem>>, %arg7: memref<1x1xf32, #tpu.memory_space<vmem>>, %arg8: memref<16x1xf32, #tpu.memory_space<vmem>>) attributes {dimension_semantics = [#tpu.dimension_semantics<parallel>], iteration_bounds = array<i64: 1>, scalar_prefetch = 0 : i64, scratch_operands = 0 : i64, tpu.core_type = #tpu.core_type<tc>, window_params = [{transform_indices = @transform_0, window_bounds = array<i64: 16, 128>}, {pipeline_mode = #tpu.pipeline_mode<synchronous>, transform_indices = @transform_1, window_bounds = array<i64: 128, 128>}, {pipeline_mode = #tpu.pipeline_mode<synchronous>, transform_indices = @transform_2, window_bounds = array<i64: 1, 128>}, {pipeline_mode = #tpu.pipeline_mode<synchronous>, transform_indices = @transform_3, window_bounds = array<i64: 128, 128>}, {pipeline_mode = #tpu.pipeline_mode<synchronous>, transform_indices = @transform_4, window_bounds = array<i64: 1, 128>}, {pipeline_mode = #tpu.pipeline_mode<synchronous>, transform_indices = @transform_5, window_bounds = array<i64: 128, 1>}, {pipeline_mode = #tpu.pipeline_mode<synchronous>, transform_indices = @transform_6, window_bounds = array<i64: 1, 1>}, {transform_indices = @transform_7, window_bounds = array<i64: 16, 1>}]} {
    %c0 = arith.constant 0 : index
    %c0_0 = arith.constant 0 : index
    %0 = vector.load %arg1[%c0, %c0_0] : memref<16x128xf32, #tpu.memory_space<vmem>>, vector<16x128xf32>
    %c0_1 = arith.constant 0 : index
    %c0_2 = arith.constant 0 : index
    %1 = vector.load %arg2[%c0_1, %c0_2] : memref<128x128xf32, #tpu.memory_space<vmem>>, vector<128x128xf32>
    %cst = arith.constant dense<0.000000e+00> : vector<16x128xf32>
    %2 = tpu.matmul %0, %1, %cst {dimension_numbers = #tpu.dot_dimension_numbers<[1], [0], [0], [1], [0, 0, 1, 1], [], []>} : vector<16x128xf32>, vector<128x128xf32>, vector<16x128xf32> -> vector<16x128xf32>
    %c0_3 = arith.constant 0 : index
    %c0_4 = arith.constant 0 : index
    %3 = vector.load %arg3[%c0_3, %c0_4] : memref<1x128xf32, #tpu.memory_space<vmem>>, vector<1x128xf32>
    %4 = vector.broadcast %3 : vector<1x128xf32> to vector<16x128xf32>
    %5 = arith.addf %2, %4 : vector<16x128xf32>
    %cst_5 = arith.constant 0.000000e+00 : f32
    %6 = vector.broadcast %cst_5 : f32 to vector<16x128xf32>
    %7 = arith.maximumf %5, %6 : vector<16x128xf32>
    %c0_6 = arith.constant 0 : index
    %c0_7 = arith.constant 0 : index
    %8 = vector.load %arg4[%c0_6, %c0_7] : memref<128x128xf32, #tpu.memory_space<vmem>>, vector<128x128xf32>
    %cst_8 = arith.constant dense<0.000000e+00> : vector<16x128xf32>
    %9 = tpu.matmul %7, %8, %cst_8 {dimension_numbers = #tpu.dot_dimension_numbers<[1], [0], [0], [1], [0, 0, 1, 1], [], []>} : vector<16x128xf32>, vector<128x128xf32>, vector<16x128xf32> -> vector<16x128xf32>
    %c0_9 = arith.constant 0 : index
    %c0_10 = arith.constant 0 : index
    %10 = vector.load %arg5[%c0_9, %c0_10] : memref<1x128xf32, #tpu.memory_space<vmem>>, vector<1x128xf32>
    %11 = vector.broadcast %10 : vector<1x128xf32> to vector<16x128xf32>
    %12 = arith.addf %9, %11 : vector<16x128xf32>
    %cst_11 = arith.constant 0.000000e+00 : f32
    %13 = vector.broadcast %cst_11 : f32 to vector<16x128xf32>
    %14 = arith.maximumf %12, %13 : vector<16x128xf32>
    %c0_12 = arith.constant 0 : index
    %c0_13 = arith.constant 0 : index
    %15 = vector.load %arg6[%c0_12, %c0_13] : memref<128x1xf32, #tpu.memory_space<vmem>>, vector<128x1xf32>
    %cst_14 = arith.constant dense<0.000000e+00> : vector<16x1xf32>
    %16 = tpu.matmul %14, %15, %cst_14 {dimension_numbers = #tpu.dot_dimension_numbers<[1], [0], [0], [1], [0, 0, 1, 1], [], []>} : vector<16x128xf32>, vector<128x1xf32>, vector<16x1xf32> -> vector<16x1xf32>
    %c0_15 = arith.constant 0 : index
    %c0_16 = arith.constant 0 : index
    %17 = vector.load %arg7[%c0_15, %c0_16] : memref<1x1xf32, #tpu.memory_space<vmem>>, vector<1x1xf32>
    %18 = vector.broadcast %17 : vector<1x1xf32> to vector<16x1xf32>
    %19 = arith.addf %16, %18 : vector<16x1xf32>
    %20 = arith.negf %19 : vector<16x1xf32>
    %21 = math.exp %20 : vector<16x1xf32>
    %cst_17 = arith.constant 1.000000e+00 : f32
    %22 = vector.broadcast %cst_17 : f32 to vector<16x1xf32>
    %23 = arith.addf %22, %21 : vector<16x1xf32>
    %24 = arith.divf %22, %23 : vector<16x1xf32>
    %c0_18 = arith.constant 0 : index
    %c0_19 = arith.constant 0 : index
    %25 = vector.load %arg8[%c0_18, %c0_19] : memref<16x1xf32, #tpu.memory_space<vmem>>, vector<16x1xf32>
    tpu.vector_store %arg8[%c0_18, %c0_19], %24 {strides = array<i32>} : memref<16x1xf32, #tpu.memory_space<vmem>>, vector<16x1xf32>,
    return
  }
  func.func @transform_0(%arg0: i32) -> (i32, i32) {
    %c0_i32 = arith.constant 0 : i32
    %c0_i32_0 = arith.constant 0 : i32
    return %arg0, %c0_i32 : i32, i32
  }
  func.func @transform_1(%arg0: i32) -> (i32, i32) {
    %c0_i32 = arith.constant 0 : i32
    %c0_i32_0 = arith.constant 0 : i32
    %c0_i32_1 = arith.constant 0 : i32
    return %c0_i32, %c0_i32_0 : i32, i32
  }
  func.func @transform_2(%arg0: i32) -> (i32, i32) {
    %c0_i32 = arith.constant 0 : i32
    %c0_i32_0 = arith.constant 0 : i32
    %c0_i32_1 = arith.constant 0 : i32
    return %c0_i32, %c0_i32_0 : i32, i32
  }
  func.func @transform_3(%arg0: i32) -> (i32, i32) {
    %c0_i32 = arith.constant 0 : i32
    %c0_i32_0 = arith.constant 0 : i32
    %c0_i32_1 = arith.constant 0 : i32
    return %c0_i32, %c0_i32_0 : i32, i32
  }
  func.func @transform_4(%arg0: i32) -> (i32, i32) {
    %c0_i32 = arith.constant 0 : i32
    %c0_i32_0 = arith.constant 0 : i32
    %c0_i32_1 = arith.constant 0 : i32
    return %c0_i32, %c0_i32_0 : i32, i32
  }
  func.func @transform_5(%arg0: i32) -> (i32, i32) {
    %c0_i32 = arith.constant 0 : i32
    %c0_i32_0 = arith.constant 0 : i32
    %c0_i32_1 = arith.constant 0 : i32
    return %c0_i32, %c0_i32_0 : i32, i32
  }
  func.func @transform_6(%arg0: i32) -> (i32, i32) {
    %c0_i32 = arith.constant 0 : i32
    %c0_i32_0 = arith.constant 0 : i32
    %c0_i32_1 = arith.constant 0 : i32
    return %c0_i32, %c0_i32_0 : i32, i32
  }
  func.func @transform_7(%arg0: i32) -> (i32, i32) {
    %c0_i32 = arith.constant 0 : i32
    %c0_i32_0 = arith.constant 0 : i32
    return %arg0, %c0_i32 : i32, i32
  }
}

</mosaic_0001>

<llo_original>
// kernel: tpu_custom_call.1
$region0: #{tpu_custom_call.1}
  #allocation0 [shape = 'u32[]', space=smem, size = 0x4, offset = 0x4, fixed_abs, tag = 'smem constant byte address 0x4 - core index']
  #allocation1 [shape = 'u32[72,128]{1,0:T(1,128)}', space=vmem, size = 0x9000, scoped, tag = 'internal scratch']
  #allocation2 [shape = 'f32[1,1]{1,0:T(1,128)S(1)}', space=vmem, size = 0x200, scoped, tag = 'scoped memory for tpu_custom_call.1']
  %s0 = inlined_call_operand.hbm [shape: f32[16,128], index: 0, kind: input, shape index: {}]
  %s1 = inlined_call_operand.vmem [shape: f32[128,128], index: 1, kind: input, shape index: {}]
  %s2 = inlined_call_operand.vmem [shape: f32[1,128], index: 2, kind: input, shape index: {}]
  %s3 = inlined_call_operand.hbm [shape: f32[128,128], index: 3, kind: input, shape index: {}]
  %s4 = inlined_call_operand.vmem [shape: f32[1,128], index: 4, kind: input, shape index: {}]
  %s5 = inlined_call_operand.vmem [shape: f32[128,1], index: 5, kind: input, shape index: {}]
  %s6 = inlined_call_operand.<no memory space> [shape: f32[1,1], index: 6, kind: input, shape index: {}]
  %s7 = inlined_call_operand.vmem [shape: f32[16,1], index: 7, kind: output, shape index: {}]
  %s8 = sld [smem:[#allocation0]]
  $region46: #{tpu_custom_call.1} parent=0
    _
  %s10 = ssub.s32 1, %s8
  %s11 = scalar_select 0, %s10, %s8
  %v12 = vstv %s6
  %13 = vst [vmem:[#allocation2] sm:$0x1] %v12
  $region1: #{tpu_custom_call.1} parent=0
    #allocation3 [shape = 'u8[8192]{0}', space=vmem, size = 0x2000, scoped, tag = 'input window, operand 0, single buffered']
    #allocation4 [shape = 's32[1]{0}', space=sflag, size = 0x4, scoped, tag = 'scoped memory for tpu_custom_call.1']
    #allocation5 [shape = 'u8[65536]{0}', space=vmem, size = 0x10000, scoped, tag = 'input window, operand 3, single buffered']
    #allocation6 [shape = 's32[1]{0}', space=sflag, size = 0x4, scoped, tag = 'scoped memory for tpu_custom_call.1']
    %14 = vsyncpa [#allocation4], 0
    %15 = vsyncpa [#allocation6], 0
    // Predicated region
    $region2: #{tpu_custom_call.1} parent=1 // pred_check
      _
    $region3: #{tpu_custom_call.1} parent=1 // pred_check_branch
      %17 = sbr.rel (0) target = $region5
    $region4: #{tpu_custom_call.1} parent=1 // pred_region
      %19 = vsyncadd [#allocation4], 0
      %s20 = sshll.u32 %s0, 4
      %s21 = int_to_ptr.hbm [resolvable:$true] %s20
      %s22 = sshll.u32 [#allocation3], 4
      %s23 = int_to_ptr.vmem [resolvable:$true] %s22
      %28 = dma.hbm_to_vmem [thread:$0]  %s21, 256, %s23, [#allocation4], 128, 128, 8
    $region5: #{tpu_custom_call.1} parent=1 // pred_fallthru
      _
    // Predicated region
    $region6: #{tpu_custom_call.1} parent=1 // pred_check
      _
    $region7: #{tpu_custom_call.1} parent=1 // pred_check_branch
      %30 = sbr.rel (0) target = $region9
    $region8: #{tpu_custom_call.1} parent=1 // pred_region
      _
    $region9: #{tpu_custom_call.1} parent=1 // pred_fallthru
      _
    // Predicated region
    $region10: #{tpu_custom_call.1} parent=1 // pred_check
      _
    $region11: #{tpu_custom_call.1} parent=1 // pred_check_branch
      %32 = sbr.rel (0) target = $region13
    $region12: #{tpu_custom_call.1} parent=1 // pred_region
      _
    $region13: #{tpu_custom_call.1} parent=1 // pred_fallthru
      _
    // Predicated region
    $region14: #{tpu_custom_call.1} parent=1 // pred_check
      _
    $region15: #{tpu_custom_call.1} parent=1 // pred_check_branch
      %34 = sbr.rel (0) target = $region17
    $region16: #{tpu_custom_call.1} parent=1 // pred_region
      %36 = vsyncadd [#allocation6], 0
      %s37 = sshll.u32 %s3, 4
      %s38 = int_to_ptr.hbm [resolvable:$true] %s37
      %s39 = sshll.u32 [#allocation5], 4
      %s40 = int_to_ptr.vmem [resolvable:$true] %s39
      %45 = dma.hbm_to_vmem [thread:$0]  %s38, 2048, %s40, [#allocation6], 128, 128, 8
    $region17: #{tpu_custom_call.1} parent=1 // pred_fallthru
      _
    // Predicated region
    $region18: #{tpu_custom_call.1} parent=1 // pred_check
      _
    $region19: #{tpu_custom_call.1} parent=1 // pred_check_branch
      %47 = sbr.rel (0) target = $region21
    $region20: #{tpu_custom_call.1} parent=1 // pred_region
      _
    $region21: #{tpu_custom_call.1} parent=1 // pred_fallthru
      _
    // Predicated region
    $region22: #{tpu_custom_call.1} parent=1 // pred_check
      _
    $region23: #{tpu_custom_call.1} parent=1 // pred_check_branch
      %49 = sbr.rel (0) target = $region25
    $region24: #{tpu_custom_call.1} parent=1 // pred_region
      _
    $region25: #{tpu_custom_call.1} parent=1 // pred_fallthru
      _
    // Predicated region
    $region26: #{tpu_custom_call.1} parent=1 // pred_check
      _
    $region27: #{tpu_custom_call.1} parent=1 // pred_check_branch
      %51 = sbr.rel (0) target = $region29
    $region28: #{tpu_custom_call.1} parent=1 // pred_region
      _
    $region29: #{tpu_custom_call.1} parent=1 // pred_fallthru
      _
    // Predicated region
    $region30: #{tpu_custom_call.1} parent=1 // pred_check
      _
    $region31: #{tpu_custom_call.1} parent=1 // pred_check_branch
      %53 = sbr.rel (0) target = $region33
    $region32: #{tpu_custom_call.1} parent=1 // pred_region
      %55 = dma.done [#allocation4], 256
    $region33: #{tpu_custom_call.1} parent=1 // pred_fallthru
      _
    // Predicated region
    $region34: #{tpu_custom_call.1} parent=1 // pred_check
      _
    $region35: #{tpu_custom_call.1} parent=1 // pred_check_branch
      %57 = sbr.rel (0) target = $region37
    $region36: #{tpu_custom_call.1} parent=1 // pred_region
      %59 = dma.done [#allocation6], 2048
    $region37: #{tpu_custom_call.1} parent=1 // pred_fallthru
      _
    %v60 = vld [vmem:[#allocation3] sm:$0xff]
    %v61 = vld [vmem:[#allocation3 + $0x8] sm:$0xff]
    %v62 = vld [vmem:[%s1] sm:$0xff]
    %v63 = vld [vmem:[%s1 + $0x8] sm:$0xff]
    %v64 = vld [vmem:[%s1 + $0x10] sm:$0xff]
    %v65 = vld [vmem:[%s1 + $0x18] sm:$0xff]
    %v66 = vld [vmem:[%s1 + $0x20] sm:$0xff]
    %v67 = vld [vmem:[%s1 + $0x28] sm:$0xff]
    %v68 = vld [vmem:[%s1 + $0x30] sm:$0xff]
    %v69 = vld [vmem:[%s1 + $0x38] sm:$0xff]
    %v70 = vld [vmem:[%s1 + $0x40] sm:$0xff]
    %v71 = vld [vmem:[%s1 + $0x48] sm:$0xff]
    %v72 = vld [vmem:[%s1 + $0x50] sm:$0xff]
    %v73 = vld [vmem:[%s1 + $0x58] sm:$0xff]
    %v74 = vld [vmem:[%s1 + $0x60] sm:$0xff]
    %v75 = vld [vmem:[%s1 + $0x68] sm:$0xff]
    %v76 = vld [vmem:[%s1 + $0x70] sm:$0xff]
    %v77 = vld [vmem:[%s1 + $0x78] sm:$0xff]
    %v78 = vld [vmem:[%s2] sm:$0x1]
    %v80 = vperm.slane %v78, 0
    %82 = vmatpush.msra.mxu0 %v77
    %83 = vmatpush.msra.mxu0 %v76
    %84 = vmatpush.msra.mxu0 %v75
    %85 = vmatpush.msra.mxu0 %v74
    %86 = vmatpush.msra.mxu0 %v73
    %87 = vmatpush.msra.mxu0 %v72
    %88 = vmatpush.msra.mxu0 %v71
    %89 = vmatpush.msra.mxu0 %v70
    %90 = vmatpush.msra.mxu0 %v69
    %91 = vmatpush.msra.mxu0 %v68
    %92 = vmatpush.msra.mxu0 %v67
    %93 = vmatpush.msra.mxu0 %v66
    %94 = vmatpush.msra.mxu0 %v65
    %95 = vmatpush.msra.mxu0 %v64
    %96 = vmatpush.msra.mxu0 %v63
    %97 = vmatpush.msra.mxu0 %v62
    %98 = vmatmul.f32.gmra.mxu0 %v60
    %v99 = vpop.f32.mrf.mxu0
    %v100 = vadd.f32 %v80, %v99
    %101 = vmatmul.f32.gmra.mxu0 %v61
    %v102 = vpop.f32.mrf.mxu0
    %v103 = vadd.f32 %v80, %v102
    %104 = vdwg.mxu0
    %v105 = vmax.f32 %v100, 0.0
    %v106 = vmax.f32 %v103, 0.0
    %v107 = vld [vmem:[#allocation5] sm:$0xff]
    %v108 = vld [vmem:[#allocation5 + $0x8] sm:$0xff]
    %v109 = vld [vmem:[#allocation5 + $0x10] sm:$0xff]
    %v110 = vld [vmem:[#allocation5 + $0x18] sm:$0xff]
    %v111 = vld [vmem:[#allocation5 + $0x20] sm:$0xff]
    %v112 = vld [vmem:[#allocation5 + $0x28] sm:$0xff]
    %v113 = vld [vmem:[#allocation5 + $0x30] sm:$0xff]
    %v114 = vld [vmem:[#allocation5 + $0x38] sm:$0xff]
    %v115 = vld [vmem:[#allocation5 + $0x40] sm:$0xff]
    %v116 = vld [vmem:[#allocation5 + $0x48] sm:$0xff]
    %v117 = vld [vmem:[#allocation5 + $0x50] sm:$0xff]
    %v118 = vld [vmem:[#allocation5 + $0x58] sm:$0xff]
    %v119 = vld [vmem:[#allocation5 + $0x60] sm:$0xff]
    %v120 = vld [vmem:[#allocation5 + $0x68] sm:$0xff]
    %v121 = vld [vmem:[#allocation5 + $0x70] sm:$0xff]
    %v122 = vld [vmem:[#allocation5 + $0x78] sm:$0xff]
    %v123 = vld [vmem:[%s4] sm:$0x1]
    %v125 = vperm.slane %v123, 0
    %127 = vmatpush.msra.mxu0 %v122
    %128 = vmatpush.msra.mxu0 %v121
    %129 = vmatpush.msra.mxu0 %v120
    %130 = vmatpush.msra.mxu0 %v119
    %131 = vmatpush.msra.mxu0 %v118
    %132 = vmatpush.msra.mxu0 %v117
    %133 = vmatpush.msra.mxu0 %v116
    %134 = vmatpush.msra.mxu0 %v115
    %135 = vmatpush.msra.mxu0 %v114
    %136 = vmatpush.msra.mxu0 %v113
    %137 = vmatpush.msra.mxu0 %v112
    %138 = vmatpush.msra.mxu0 %v111
    %139 = vmatpush.msra.mxu0 %v110
    %140 = vmatpush.msra.mxu0 %v109
    %141 = vmatpush.msra.mxu0 %v108
    %142 = vmatpush.msra.mxu0 %v107
    %143 = vmatmul.f32.gmra.mxu0 %v105
    %v144 = vpop.f32.mrf.mxu0
    %v145 = vadd.f32 %v125, %v144
    %146 = vmatmul.f32.gmra.mxu0 %v106
    %v147 = vpop.f32.mrf.mxu0
    %v148 = vadd.f32 %v125, %v147
    %149 = vdwg.mxu0
    %v150 = vmax.f32 %v145, 0.0
    %v151 = vmax.f32 %v148, 0.0
    %v152 = vld [vmem:[%s5] sm:$0xff]
    %v153 = vld [vmem:[%s5 + $0x8] sm:$0xff]
    %v154 = vld [vmem:[%s5 + $0x10] sm:$0xff]
    %v155 = vld [vmem:[%s5 + $0x18] sm:$0xff]
    %v156 = vld [vmem:[%s5 + $0x20] sm:$0xff]
    %v157 = vld [vmem:[%s5 + $0x28] sm:$0xff]
    %v158 = vld [vmem:[%s5 + $0x30] sm:$0xff]
    %v159 = vld [vmem:[%s5 + $0x38] sm:$0xff]
    %v160 = vld [vmem:[%s5 + $0x40] sm:$0xff]
    %v161 = vld [vmem:[%s5 + $0x48] sm:$0xff]
    %v162 = vld [vmem:[%s5 + $0x50] sm:$0xff]
    %v163 = vld [vmem:[%s5 + $0x58] sm:$0xff]
    %v164 = vld [vmem:[%s5 + $0x60] sm:$0xff]
    %v165 = vld [vmem:[%s5 + $0x68] sm:$0xff]
    %v166 = vld [vmem:[%s5 + $0x70] sm:$0xff]
    %v167 = vld [vmem:[%s5 + $0x78] sm:$0xff]
    %v168 = vld [vmem:[#allocation2] sm:$0x1]
    %v170 = vperm.slane %v168, 0
    %172 = vmatpush.msra.mxu0 %v167
    %173 = vmatpush.msra.mxu0 %v166
    %174 = vmatpush.msra.mxu0 %v165
    %175 = vmatpush.msra.mxu0 %v164
    %176 = vmatpush.msra.mxu0 %v163
    %177 = vmatpush.msra.mxu0 %v162
    %178 = vmatpush.msra.mxu0 %v161
    %179 = vmatpush.msra.mxu0 %v160
    %180 = vmatpush.msra.mxu0 %v159
    %181 = vmatpush.msra.mxu0 %v158
    %182 = vmatpush.msra.mxu0 %v157
    %183 = vmatpush.msra.mxu0 %v156
    %184 = vmatpush.msra.mxu0 %v155
    %185 = vmatpush.msra.mxu0 %v154
    %186 = vmatpush.msra.mxu0 %v153
    %187 = vmatpush.msra.mxu0 %v152
    %188 = vmatmul.f32.gmra.mxu0 %v150
    %v189 = vpop.f32.mrf.mxu0
    %v190 = vadd.f32 %v170, %v189
    %191 = vmatmul.f32.gmra.mxu0 %v151
    %v192 = vpop.f32.mrf.mxu0
    %v193 = vadd.f32 %v170, %v192
    %194 = vdwg.mxu0
    %v195 = vxor.u32 %v190, 2147483648
    %v196 = vxor.u32 %v193, 2147483648
    %v197 = vmul.f32 %v195, 1.442695
    %v198 = vpow.pop %v197
    %v199 = vmul.f32 %v196, 1.442695
    %v200 = vpow.pop %v199
    %v201 = vadd.f32 %v198, 1.0
    %v202 = vadd.f32 %v200, 1.0
    %v203 = vrcp.pop %v201
    %v204 = vmul.f32 %v201, %v203
    %v205 = vsub.f32 1.0, %v204
    %v206 = vmul.f32 %v203, %v205
    %v207 = vadd.f32 %v203, %v206
    %vm208 = vweird.f32 %v201
    %vm209 = vweird.f32 %v203
    %vm210 = vmor %vm208, %vm209
    %v211 = vsel %vm210, %v203, %v207
    %v212 = vand.u32 2147483647, %v201
    %vm213 = vcmp.eq.f32.partialorder %v212, 8.507059e+37
    %v214 = vand.u32 %v201, 2147483648
    %v215 = vor.u32 1.1754944e-38, %v214
    %v216 = vsel %vm213, %v215, %v211
    %v217 = vmul.f32 1.0, %v216
    %v218 = vrcp.pop %v202
    %v219 = vmul.f32 %v202, %v218
    %v220 = vsub.f32 1.0, %v219
    %v221 = vmul.f32 %v218, %v220
    %v222 = vadd.f32 %v218, %v221
    %vm223 = vweird.f32 %v202
    %vm224 = vweird.f32 %v218
    %vm225 = vmor %vm223, %vm224
    %v226 = vsel %vm225, %v218, %v222
    %v227 = vand.u32 2147483647, %v202
    %vm228 = vcmp.eq.f32.partialorder %v227, 8.507059e+37
    %v229 = vand.u32 %v202, 2147483648
    %v230 = vor.u32 1.1754944e-38, %v229
    %v231 = vsel %vm228, %v230, %v226
    %v232 = vmul.f32 1.0, %v231
    %vm233 = vcmask 7168
    %234 = vst.msk [vmem:[%s7] sm:$0xff] %vm233, %v217
    %235 = vst.msk [vmem:[%s7 + $0x8] sm:$0xff] %vm233, %v232
    // Predicated region
    $region38: #{tpu_custom_call.1} parent=1 // pred_check
      _
    $region39: #{tpu_custom_call.1} parent=1 // pred_check_branch
      %237 = sbr.rel (0) target = $region41
    $region40: #{tpu_custom_call.1} parent=1 // pred_region
      _
    $region41: #{tpu_custom_call.1} parent=1 // pred_fallthru
      _
    // Predicated region
    $region42: #{tpu_custom_call.1} parent=1 // pred_check
      _
    $region43: #{tpu_custom_call.1} parent=1 // pred_check_branch
      %239 = sbr.rel (0) target = $region45
    $region44: #{tpu_custom_call.1} parent=1 // pred_region
      _
    $region45: #{tpu_custom_call.1} parent=1 // pred_fallthru
      _
    %240 = vsyncpa [#allocation4], 1
    %241 = vsyncpa [#allocation6], 1

</llo_original>
